<compile_context>
chip_gen: v6e
topology: v6e:2x2x1
jax: 0.10.0
libtpu: 0.0.40
codegen_flags: <defaults>
</compile_context>

<pallas_src>
import functools
import types

import jax
import jax.numpy as jnp
from jax.experimental import pallas as pl
from jax.experimental.pallas import tpu as pltpu


def _VMEM():
    return pl.BlockSpec(memory_space=pltpu.MemorySpace.VMEM)


# ----------------------------------------------------------------------------- kernels
def _mlp_kernel(x_ref, w1_ref, b1_ref, w2_ref, b2_ref, o_ref):
    # fused Linear -> ReLU -> Linear.  Weights are bf16 (MXU native), bias/acc stay f32.
    x = x_ref[...].astype(jnp.bfloat16)
    h = jnp.dot(x, w1_ref[...], preferred_element_type=jnp.float32) + b1_ref[...]
    h = jnp.maximum(h, 0.0).astype(jnp.bfloat16)
    o = jnp.dot(h, w2_ref[...], preferred_element_type=jnp.float32) + b2_ref[...]
    o_ref[...] = o.astype(o_ref.dtype)


def _softmax_wsum_kernel(s_ref, x_ref, o_ref):
    # out = softmax(scores) @ X   (scores: [1,S], X: [S,D], out: [1,D]); f32 math (v5e-safe).
    s = s_ref[...]
    m = jnp.max(s, axis=-1, keepdims=True)
    e = jnp.exp(s - m)
    w = e * pl.reciprocal(jnp.sum(e, axis=-1, keepdims=True), approx=True)
    o_ref[...] = jnp.dot(w, x_ref[...], preferred_element_type=jnp.float32).astype(o_ref.dtype)


def _segment_wsum_kernel(starts_ref, ends_ref, hand_ref, video_ref, o_ref):
    # grid=(num_segments,) : out[i] = softmax(hand[s:e]) @ video[s:e]
    # degenerate s >= e collapses to a one-hot at s == video[s] (matches torch branch).
    i = pl.program_id(0)
    s = starts_ref[i]
    e = jnp.maximum(ends_ref[i], s + 1)
    t = video_ref.shape[0]
    idx = jax.lax.broadcasted_iota(jnp.int32, (1, t), 1)
    mask = (idx >= s) & (idx < e)
    sc = jnp.where(mask, hand_ref[...], -jnp.inf)
    m = jnp.max(sc, axis=-1, keepdims=True)
    ex = jnp.where(mask, jnp.exp(sc - m), 0.0)
    w = ex * pl.reciprocal(jnp.sum(ex, axis=-1, keepdims=True), approx=True)
    res = jnp.dot(w, video_ref[...], preferred_element_type=jnp.float32)
    o_ref[...] = res[None].astype(o_ref.dtype)


def _build_pre_kernel(vseg_ref, tseg_ref, q_ref, at_ref, ab_ref,
                      w1v_ref, w1t_ref, w1q_ref, w1b_ref, b1_ref,
                      w2_ref, b2_ref, o_ref):
    # Fused: x = [video_seg | text_seg | question+a_text | a_buttons] -> mlp_pre(x)
    # for every (step, action) row at once.  The concat is folded into fc1 by splitting
    # W1 into row blocks, so no concatenated intermediate ever leaves VMEM/vregs.
    qa = (q_ref[...] + at_ref[...]).astype(jnp.bfloat16)                       # (N, Dt)
    h = jnp.dot(qa, w1q_ref[...], preferred_element_type=jnp.float32)
    h = h + jnp.dot(ab_ref[...].astype(jnp.bfloat16), w1b_ref[...],
                    preferred_element_type=jnp.float32)
    h = h + jnp.dot(vseg_ref[...].astype(jnp.bfloat16), w1v_ref[...],
                    preferred_element_type=jnp.float32)                        # (1,H) broadcast
    h = h + jnp.dot(tseg_ref[...].astype(jnp.bfloat16), w1t_ref[...],
                    preferred_element_type=jnp.float32)
    h = jnp.maximum(h + b1_ref[...], 0.0).astype(jnp.bfloat16)
    o = jnp.dot(h, w2_ref[...], preferred_element_type=jnp.float32) + b2_ref[...]
    o_ref[...] = o.astype(o_ref.dtype)


def _step_proj_kernel(history_max, na_ref, pre_ref, state0_ref,
                      w1i_ref, w1s_ref, b1_ref, w2_ref, b2_ref,
                      o_ref, state_scr):
    # Sequential part only.  grid=(num_steps,) ('arbitrary'); recurrent state lives in a VMEM
    # scratch persisting across grid iterations.  proj.fc1 is split into rows acting on
    # `inputs` (w1i) and on `state` (w1s), so concat([inputs, state]) is never materialized.
    i = pl.program_id(0)

    @pl.when(i == 0)
    def _():
        state_scr[...] = state0_ref[...]

    x = pre_ref[0]                                                             # (A_max, D) f32
    h = jnp.dot(x.astype(jnp.bfloat16), w1i_ref[...],
                preferred_element_type=jnp.float32)
    h = h + jnp.dot(state_scr[...].astype(jnp.bfloat16), w1s_ref[...],
                    preferred_element_type=jnp.float32)                        # (1,H) broadcast
    h = jnp.maximum(h + b1_ref[...], 0.0).astype(jnp.bfloat16)
    logits = jnp.dot(h, w2_ref[...], preferred_element_type=jnp.float32) + b2_ref[...]  # (A,1)

    a_max = x.shape[0]
    row = jax.lax.broadcasted_iota(jnp.int32, (a_max, 1), 0)
    valid = row < na_ref[i]

    # write the step's logits as one lane-oriented row: (A,1) -> (1,A) via mask+reduce
    r2 = jax.lax.broadcasted_iota(jnp.int32, (a_max, a_max), 0)
    c2 = jax.lax.broadcasted_iota(jnp.int32, (a_max, a_max), 1)
    lg = jnp.broadcast_to(logits, (a_max, a_max))
    o_ref[...] = jnp.sum(jnp.where(r2 == c2, lg, 0.0), axis=0, keepdims=True)[None]

    if history_max:                                   # static config flag
        lm = jnp.where(valid, logits, -jnp.inf)
        best = jnp.max(lm, axis=0, keepdims=True)                               # (1,1)
        am = jnp.min(jnp.where((lm == best) & valid, row, a_max),
                     axis=0, keepdims=True)                                     # (1,1) int32
        state_scr[...] = jnp.sum(jnp.where(row == am, x, 0.0), axis=0, keepdims=True)


# ----------------------------------------------------------------------------- wrappers
def mlp_apply(params, x, *, row_tile=256):
    """x: [N, Din] -> [N, Dout] through the fused MLP kernel.  Large N gets a row-tiled grid
    ('parallel' -> v7x megacore) with the bf16 weights kept VMEM-resident via constant index_maps."""
    w1, b1, w2, b2 = params
    x = x.astype(jnp.float32)
    n, din = x.shape
    h = w1.shape[1]
    dout = w2.shape[1]

    if n <= row_tile:                                   # single block, no grid
        return pl.pallas_call(
            _mlp_kernel,
            out_shape=jax.ShapeDtypeStruct((n, dout), jnp.float32),
            in_specs=[_VMEM() for _ in range(5)],
            out_specs=_VMEM(),
        )(x, w1, b1, w2, b2)

    n_pad = ((n + row_tile - 1) // row_tile) * row_tile
    xp = jnp.pad(x, ((0, n_pad - n), (0, 0)))
    out = pl.pallas_call(
        _mlp_kernel,
        out_shape=jax.ShapeDtypeStruct((n_pad, dout), jnp.float32),
        grid_spec=pltpu.PrefetchScalarGridSpec(
            num_scalar_prefetch=0,
            grid=(n_pad // row_tile,),
            in_specs=[pl.BlockSpec((row_tile, din), lambda i: (i, 0)),
                      pl.BlockSpec((din, h), lambda i: (0, 0)),     # weights: constant block
                      pl.BlockSpec((1, h), lambda i: (0, 0)),       #  -> stay VMEM-resident
                      pl.BlockSpec((h, dout), lambda i: (0, 0)),
                      pl.BlockSpec((1, dout), lambda i: (0, 0))],
            out_specs=pl.BlockSpec((row_tile, dout), lambda i: (i, 0)),
        ),
        compiler_params=pltpu.CompilerParams(dimension_semantics=("parallel",)),
    )(xp, w1, b1, w2, b2)
    return out[:n]


def softmax_weighted_sum(scores, x):
    """scores: [S], x: [S, D] -> [1, D] == softmax(scores) @ x."""
    s2 = scores.reshape(1, -1).astype(jnp.float32)
    d = x.shape[1]
    return pl.pallas_call(
        _softmax_wsum_kernel,
        out_shape=jax.ShapeDtypeStruct((1, d), jnp.float32),
        in_specs=[_VMEM(), _VMEM()],
        out_specs=_VMEM(),
    )(s2, x.astype(jnp.float32))


def segment_weighted_sum(starts, ends, hand_score, video_t):
    """All ragged segments in ONE gridded call; (start,end) pairs arrive via scalar prefetch."""
    p = int(starts.shape[0])
    t, d = video_t.shape
    hand2 = hand_score.reshape(1, t).astype(jnp.float32)
    out = pl.pallas_call(
        _segment_wsum_kernel,
        out_shape=jax.ShapeDtypeStruct((p, 1, d), jnp.float32),
        grid_spec=pltpu.PrefetchScalarGridSpec(
            num_scalar_prefetch=2,
            grid=(p,),
            in_specs=[pl.BlockSpec((1, t), lambda i, st, en: (0, 0)),
                      pl.BlockSpec((t, d), lambda i, st, en: (0, 0))],
            out_specs=pl.BlockSpec((1, 1, d), lambda i, st, en: (i, 0, 0)),
        ),
        compiler_params=pltpu.CompilerParams(dimension_semantics=("parallel",)),
    )(starts, ends, hand2, video_t.astype(jnp.float32))
    return out.reshape(p, d)


# ----------------------------------------------------------------------------- params
def init_mlp(key, din, dout, scale=0.05):
    k1, k2, k3, k4 = jax.random.split(key, 4)
    h = 4 * din
    w1 = (jax.random.normal(k1, (din, h), jnp.float32) * scale).astype(jnp.bfloat16)
    b1 = jax.random.normal(k2, (1, h), jnp.float32) * scale
    w2 = (jax.random.normal(k3, (h, dout), jnp.float32) * scale).astype(jnp.bfloat16)
    b2 = jax.random.normal(k4, (1, dout), jnp.float32) * scale
    return (w1, b1, w2, b2)


class Q2AInteractionLocal:
    """Eval-mode port of the PyTorch Q2A_Interaction_Local module ('mlp' history arch)."""

    def __init__(self, cfg, key):
        ks = jax.random.split(key, 6)
        self.mlp_v = init_mlp(ks[0], cfg.INPUT.VISUAL_DIM, cfg.INPUT.VISUAL_OUT)
        self.mlp_t = init_mlp(ks[1], cfg.INPUT.TEXT_DIM, cfg.INPUT.TEXT_OUT)
        self.mlp_pre = init_mlp(ks[2], cfg.INPUT.VISUAL_DIM * 4, cfg.MODEL.DIM_STATE)
        self.state = jax.random.normal(ks[3], (1, cfg.MODEL.DIM_STATE), jnp.float32)
        if cfg.MODEL.HISTORY.ARCH == 'mlp':
            self.proj = init_mlp(ks[4], cfg.MODEL.DIM_STATE * 2, 1)
        else:
            # TODO(synk): GRUCell history arch not implemented; only the 'mlp' arch is ported.
            raise NotImplementedError("only 'mlp' history arch is implemented")
        pw1, pb1, pw2, pb2 = self.proj
        d = cfg.MODEL.DIM_STATE
        self._proj_w1_in = pw1[:d]          # fc1 rows acting on `inputs`
        self._proj_w1_state = pw1[d:]       # fc1 rows acting on `state`  (concat folded away)
        self._proj_rest = (pb1, pw2, pb2)
        self.history_train = cfg.MODEL.HISTORY.TRAIN
        self.history_val = cfg.MODEL.HISTORY.VAL
        self.function_centric = cfg.MODEL.FUNCTION_CENTRIC
        self.egovlp = cfg.INPUT.ISEGOVLP
        self.visual_dim = cfg.INPUT.VISUAL_DIM
        self.cfg = cfg

    # ---- fused build + mlp_pre over every (step, action) row
    def _build_pre(self, video_seg, text_seg, question_t, a_texts, ab):
        w1, b1, w2, b2 = self.mlp_pre
        dv, dt = video_seg.shape[1], text_seg.shape[1]
        dq, dab = a_texts.shape[1], ab.shape[1]
        assert dv + dt + dq + dab == w1.shape[0], (
            f"mlp_pre expects input width {w1.shape[0]}, got {dv + dt + dq + dab}")
        w1v, w1t = w1[:dv], w1[dv:dv + dt]
        w1q, w1b = w1[dv + dt:dv + dt + dq], w1[dv + dt + dq:]
        n = a_texts.shape[0]
        dstate = w2.shape[1]
        return pl.pallas_call(
            _build_pre_kernel,
            out_shape=jax.ShapeDtypeStruct((n, dstate), jnp.float32),
            in_specs=[_VMEM() for _ in range(12)],
            out_specs=_VMEM(),
        )(video_seg.astype(jnp.float32), text_seg.astype(jnp.float32),
          question_t.astype(jnp.float32), a_texts.astype(jnp.float32),
          ab.astype(jnp.float32), w1v, w1t, w1q, w1b, b1, w2, b2)

    # ---- the sequential proj + argmax state update in one gridded kernel
    def _step_proj(self, pre_steps, a_counts):
        num_steps, a_max, d = pre_steps.shape
        w1i, w1s = self._proj_w1_in, self._proj_w1_state
        b1, w2, b2 = self._proj_rest
        h = w1i.shape[1]
        kernel = functools.partial(_step_proj_kernel, self.history_val == 'max')
        out = pl.pallas_call(
            kernel,
            out_shape=jax.ShapeDtypeStruct((num_steps, 1, a_max), jnp.float32),
            grid_spec=pltpu.PrefetchScalarGridSpec(
                num_scalar_prefetch=1,
                grid=(num_steps,),
                in_specs=[
                    pl.BlockSpec((1, a_max, d), lambda i, na: (i, 0, 0)),   # per-step inputs
                    pl.BlockSpec((1, d), lambda i, na: (0, 0)),             # initial state
                    pl.BlockSpec((d, h), lambda i, na: (0, 0)),             # weights: constant
                    pl.BlockSpec((d, h), lambda i, na: (0, 0)),             #  -> VMEM-resident
                    pl.BlockSpec((1, h), lambda i, na: (0, 0)),
                    pl.BlockSpec((h, 1), lambda i, na: (0, 0)),
                    pl.BlockSpec((1, 1), lambda i, na: (0, 0)),
                ],
                out_specs=pl.BlockSpec((1, 1, a_max), lambda i, na: (i, 0, 0)),
                scratch_shapes=[pltpu.VMEM((1, d), jnp.float32)],           # recurrent state
            ),
            compiler_params=pltpu.CompilerParams(dimension_semantics=("arbitrary",)),
        )(a_counts, pre_steps.astype(jnp.float32), self.state, w1i, w1s, b1, w2, b2)
        return out.reshape(num_steps, a_max)

    def forward(self, batch):
        # TODO(synk): training branch (cross-entropy loss accumulation) not ported; eval only.
        results = []
        for video, script, question, para, actions, label, meta in batch:
            if self.function_centric:
                raw_score = jnp.asarray(meta['paras_score'], jnp.float32)
                timestamps = meta['paras_timestamp']
                main_text = para
            else:
                raw_score = jnp.asarray(meta['sents_score'], jnp.float32)
                timestamps = meta['sents_timestamp']
                main_text = script
            hand_score = jnp.asarray(meta['hand_score'], jnp.float32)

            # ---- one mlp_t call for EVERY text row (para/script + question + all action texts)
            a_text_raw = [jnp.concatenate([a['text'] for a in step], axis=0) for step in actions]
            a_counts = [int(t.shape[0]) for t in a_text_raw]
            n_main = main_text.shape[0]
            text_all = jnp.concatenate([main_text, question] + a_text_raw, axis=0)
            text_out = mlp_apply(self.mlp_t, text_all)
            main_t = text_out[:n_main]                               # [P, TEXT_OUT]
            question_t = text_out[n_main:n_main + 1]                 # [1, TEXT_OUT]
            a_texts_all = text_out[n_main + 1:]                      # [sum(A_i), TEXT_OUT]

            # ---- one mlp_v call for EVERY visual row (video frames + all action buttons)
            btn_raw = [jnp.stack([a['button'].reshape(-1) for a in step], axis=0)
                       for step in actions]
            buttons_all = jnp.concatenate(btn_raw, axis=0)           # [sum(A_i), nb*VISUAL_DIM]
            # NOTE: the torch code chunks buttons by TEXT_OUT, which only works when
            # TEXT_OUT == VISUAL_DIM; chunk by mlp_v's true input width instead.
            assert buttons_all.shape[1] % self.visual_dim == 0
            t_frames = video.shape[0]
            vis_all = jnp.concatenate([video, buttons_all.reshape(-1, self.visual_dim)], axis=0)
            vis_out = mlp_apply(self.mlp_v, vis_all)
            video_t = vis_out[:t_frames]                             # [T, VISUAL_OUT]
            ab_all = vis_out[t_frames:].reshape(buttons_all.shape[0], -1)  # [sum(A_i), nb*VOUT]

            # ---- ragged per-segment weighted sums (one gridded kernel), then the shared
            #      softmax(raw_score) reduction for text_seg & video_seg fused into one call
            if self.egovlp:
                video_rows = video_t
                text_seg = softmax_weighted_sum(raw_score, main_t)
                video_seg = softmax_weighted_sum(raw_score, video_rows)
            else:
                starts = jnp.asarray([int(s) for s, _ in timestamps], jnp.int32)
                ends = jnp.asarray([int(e) for _, e in timestamps], jnp.int32)
                video_rows = segment_weighted_sum(starts, ends, hand_score, video_t)
                if video_rows.shape[0] == main_t.shape[0]:
                    both = softmax_weighted_sum(
                        raw_score, jnp.concatenate([main_t, video_rows], axis=1))
                    text_seg = both[:, :main_t.shape[1]]
                    video_seg = both[:, main_t.shape[1]:]
                else:
                    text_seg = softmax_weighted_sum(raw_score, main_t)
                    video_seg = softmax_weighted_sum(raw_score, video_rows)

            # ---- fused build + mlp_pre for every (step, action) row at once
            pre_all = self._build_pre(video_seg, text_seg, question_t, a_texts_all, ab_all)

            # ---- sequential proj + argmax-state update inside ONE gridded kernel
            a_max = max(a_counts)
            dstate = pre_all.shape[1]
            chunks, off = [], 0
            for a in a_counts:
                blk = pre_all[off:off + a]
                if a < a_max:
                    blk = jnp.concatenate(
                        [blk, jnp.zeros((a_max - a, dstate), blk.dtype)], axis=0)
                chunks.append(blk)
                off += a
            pre_steps = jnp.stack(chunks, axis=0)                    # [num_steps, A_max, D]
            logits_all = self._step_proj(pre_steps, jnp.asarray(a_counts, jnp.int32))

            out_meta = dict(meta)
            out_meta['scores'] = [logits_all[i, :a_counts[i]] for i in range(len(a_counts))]
            results.append(out_meta)
        return results


# ----------------------------------------------------------------------------- demo
def make_cfg():
    cfg = types.SimpleNamespace()
    cfg.INPUT = types.SimpleNamespace(VISUAL_DIM=32, VISUAL_OUT=32,
                                      TEXT_DIM=32, TEXT_OUT=32, ISEGOVLP=False)
    cfg.MODEL = types.SimpleNamespace(
        DIM_STATE=32, FUNCTION_CENTRIC=True,
        HISTORY=types.SimpleNamespace(ARCH='mlp', TRAIN='max', VAL='max'))
    return cfg


if __name__ == "__main__":
    cfg = make_cfg()
    key = jax.random.PRNGKey(0)
    k_model, k_data = jax.random.split(key)
    model = Q2AInteractionLocal(cfg, k_model)

    T, P, S_sents = 16, 3, 5
    num_steps, A = 2, 4
    dks = jax.random.split(k_data, 10)

    video = jax.random.normal(dks[0], (T, cfg.INPUT.VISUAL_DIM), jnp.float32)
    script = jax.random.normal(dks[1], (S_sents, cfg.INPUT.TEXT_DIM), jnp.float32)
    question = jax.random.normal(dks[2], (1, cfg.INPUT.TEXT_DIM), jnp.float32)
    para = jax.random.normal(dks[3], (P, cfg.INPUT.TEXT_DIM), jnp.float32)
    hand_score = jax.random.normal(dks[4], (T,), jnp.float32)
    paras_score = jax.random.normal(dks[5], (P,), jnp.float32)

    actions = []
    akeys = jax.random.split(dks[6], num_steps * A * 2).reshape(num_steps, A, 2, -1)
    for i in range(num_steps):
        step = []
        for j in range(A):
            step.append({
                'text': jax.random.normal(akeys[i, j, 0], (1, cfg.INPUT.TEXT_DIM), jnp.float32),
                'button': jax.random.normal(akeys[i, j, 1], (cfg.INPUT.VISUAL_DIM,), jnp.float32),
            })
        actions.append(step)

    label = jnp.zeros((num_steps,), jnp.int32)
    meta = {
        'paras_score': paras_score,
        'paras_timestamp': [(0, 5), (5, 5), (8, 16)],   # second seg degenerate -> video[5]
        'sents_score': jax.random.normal(dks[7], (S_sents,), jnp.float32),
        'sents_timestamp': [(0, 3), (3, 8), (8, 12), (12, 12), (12, 16)],
        'hand_score': hand_score,
    }

    batch = [(video, script, question, para, actions, label, meta)]
    results = model.forward(batch)

    flat = [s for m in results for s in m['scores']]
    jax.block_until_ready(flat)
    assert len(flat) == num_steps and all(s.shape == (A,) for s in flat)
    print("KERNEL_OK")
</pallas_src>

<mosaic_0001>
module attributes {stable_mosaic.version = 11 : i64} {
  func.func @_mlp_kernel(%arg0: memref<12x32xf32, #tpu.memory_space<vmem>>, %arg1: memref<32x128xbf16, #tpu.memory_space<vmem>>, %arg2: memref<1x128xf32, #tpu.memory_space<vmem>>, %arg3: memref<128x32xbf16, #tpu.memory_space<vmem>>, %arg4: memref<1x32xf32, #tpu.memory_space<vmem>>, %arg5: memref<12x32xf32, #tpu.memory_space<vmem>>) attributes {dimension_semantics = [], scalar_prefetch = 0 : i64, scratch_operands = 0 : i64, tpu.core_type = #tpu.core_type<tc>} {
    %c0 = arith.constant 0 : index
    %c0_0 = arith.constant 0 : index
    %0 = vector.load %arg0[%c0, %c0_0] : memref<12x32xf32, #tpu.memory_space<vmem>>, vector<12x32xf32>
    %1 = arith.truncf %0 : vector<12x32xf32> to vector<12x32xbf16>
    %c0_1 = arith.constant 0 : index
    %c0_2 = arith.constant 0 : index
    %2 = vector.load %arg1[%c0_1, %c0_2] : memref<32x128xbf16, #tpu.memory_space<vmem>>, vector<32x128xbf16>
    %cst = arith.constant dense<0.000000e+00> : vector<12x128xf32>
    %3 = tpu.matmul %1, %2, %cst {dimension_numbers = #tpu.dot_dimension_numbers<[1], [0], [0], [1], [0, 0, 1, 1], [], []>} : vector<12x32xbf16>, vector<32x128xbf16>, vector<12x128xf32> -> vector<12x128xf32>
    %c0_3 = arith.constant 0 : index
    %c0_4 = arith.constant 0 : index
    %4 = vector.load %arg2[%c0_3, %c0_4] : memref<1x128xf32, #tpu.memory_space<vmem>>, vector<1x128xf32>
    %5 = vector.broadcast %4 : vector<1x128xf32> to vector<12x128xf32>
    %6 = arith.addf %3, %5 : vector<12x128xf32>
    %cst_5 = arith.constant 0.000000e+00 : f32
    %7 = vector.broadcast %cst_5 : f32 to vector<12x128xf32>
    %8 = arith.maximumf %6, %7 : vector<12x128xf32>
    %9 = arith.truncf %8 : vector<12x128xf32> to vector<12x128xbf16>
    %c0_6 = arith.constant 0 : index
    %c0_7 = arith.constant 0 : index
    %10 = vector.load %arg3[%c0_6, %c0_7] : memref<128x32xbf16, #tpu.memory_space<vmem>>, vector<128x32xbf16>
    %cst_8 = arith.constant dense<0.000000e+00> : vector<12x32xf32>
    %11 = tpu.matmul %9, %10, %cst_8 {dimension_numbers = #tpu.dot_dimension_numbers<[1], [0], [0], [1], [0, 0, 1, 1], [], []>} : vector<12x128xbf16>, vector<128x32xbf16>, vector<12x32xf32> -> vector<12x32xf32>
    %c0_9 = arith.constant 0 : index
    %c0_10 = arith.constant 0 : index
    %12 = vector.load %arg4[%c0_9, %c0_10] : memref<1x32xf32, #tpu.memory_space<vmem>>, vector<1x32xf32>
    %13 = vector.broadcast %12 : vector<1x32xf32> to vector<12x32xf32>
    %14 = arith.addf %11, %13 : vector<12x32xf32>
    %c0_11 = arith.constant 0 : index
    %c0_12 = arith.constant 0 : index
    %15 = vector.load %arg5[%c0_11, %c0_12] : memref<12x32xf32, #tpu.memory_space<vmem>>, vector<12x32xf32>
    tpu.vector_store %arg5[%c0_11, %c0_12], %14 {strides = array<i32>} : memref<12x32xf32, #tpu.memory_space<vmem>>, vector<12x32xf32>,
    return
  }
}

</mosaic_0001>

<llo_original>
// kernel: tpu_custom_call.1
$region0: #{tpu_custom_call.1}
  #allocation0 [shape = 'u32[]', space=smem, size = 0x4, offset = 0x4, fixed_abs, tag = 'smem constant byte address 0x4 - core index']
  #allocation1 [shape = 'u32[144,128]{1,0:T(1,128)}', space=vmem, size = 0x12000, scoped, tag = 'internal scratch']
  %s0 = inlined_call_operand.vmem [shape: f32[12,32], index: 0, kind: input, shape index: {}]
  %s1 = inlined_call_operand.vmem [shape: bf16[32,128], index: 1, kind: input, shape index: {}]
  %s2 = inlined_call_operand.vmem [shape: f32[1,128], index: 2, kind: input, shape index: {}]
  %s3 = inlined_call_operand.vmem [shape: bf16[128,32], index: 3, kind: input, shape index: {}]
  %s4 = inlined_call_operand.vmem [shape: f32[1,32], index: 4, kind: input, shape index: {}]
  %s5 = inlined_call_operand.hbm [shape: f32[12,32], index: 5, kind: output, shape index: {}]
  %s6 = sld [smem:[#allocation0]]
  $region30: #{tpu_custom_call.1} parent=0
    _
  %s8 = ssub.s32 1, %s6
  %s9 = scalar_select 0, %s8, %s6
  $region1: #{tpu_custom_call.1} parent=0
    #allocation2 [shape = 'u8[8192]{0}', space=vmem, size = 0x2000, scoped, tag = 'output window, operand 0, single buffered']
    #allocation3 [shape = 's32[1]{0}', space=sflag, size = 0x4, scoped, tag = 'scoped memory for tpu_custom_call.1']
    %10 = vsyncpa [#allocation3], 0
    // Predicated region
    $region2: #{tpu_custom_call.1} parent=1 // pred_check
      _
    $region3: #{tpu_custom_call.1} parent=1 // pred_check_branch
      %12 = sbr.rel (0) target = $region5
    $region4: #{tpu_custom_call.1} parent=1 // pred_region
      _
    $region5: #{tpu_custom_call.1} parent=1 // pred_fallthru
      _
    // Predicated region
    $region6: #{tpu_custom_call.1} parent=1 // pred_check
      _
    $region7: #{tpu_custom_call.1} parent=1 // pred_check_branch
      %14 = sbr.rel (0) target = $region9
    $region8: #{tpu_custom_call.1} parent=1 // pred_region
      _
    $region9: #{tpu_custom_call.1} parent=1 // pred_fallthru
      _
    // Predicated region
    $region10: #{tpu_custom_call.1} parent=1 // pred_check
      _
    $region11: #{tpu_custom_call.1} parent=1 // pred_check_branch
      %16 = sbr.rel (0) target = $region13
    $region12: #{tpu_custom_call.1} parent=1 // pred_region
      _
    $region13: #{tpu_custom_call.1} parent=1 // pred_fallthru
      _
    // Predicated region
    $region14: #{tpu_custom_call.1} parent=1 // pred_check
      _
    $region15: #{tpu_custom_call.1} parent=1 // pred_check_branch
      %18 = sbr.rel (0) target = $region17
    $region16: #{tpu_custom_call.1} parent=1 // pred_region
      _
    $region17: #{tpu_custom_call.1} parent=1 // pred_fallthru
      _
    // Predicated region
    $region18: #{tpu_custom_call.1} parent=1 // pred_check
      _
    $region19: #{tpu_custom_call.1} parent=1 // pred_check_branch
      %20 = sbr.rel (0) target = $region21
    $region20: #{tpu_custom_call.1} parent=1 // pred_region
      _
    $region21: #{tpu_custom_call.1} parent=1 // pred_fallthru
      _
    %v22 = vld [vmem:[%s0] sm:$0xff]
    %v23 = vld [vmem:[%s0 + $0x8] sm:$0xf]
    %v24 = vpack.c.bf16 %v23, %v22
    %v25 = vld [vmem:[%s1] sm:$0xf]
    %v26 = vld [vmem:[%s1 + $0x4] sm:$0xf]
    %v27 = vld [vmem:[%s1 + $0x8] sm:$0xf]
    %v28 = vld [vmem:[%s1 + $0xc] sm:$0xf]
    %v29 = vld [vmem:[%s2] sm:$0x1]
    %v31 = vlaneseq
    %v32 = vshrl.u32 %v31, 7
    %v33 = vsub.s32 0, %v32
    %v34 = vrot.slane %v29, %v33
    %v40 = vunpack.c.l.b16 %v25
    %v41 = vunpack.c.l.b16 %v26
    %v42 = vunpack.c.l.b16 %v27
    %v43 = vunpack.c.l.b16 %v28
    %v44 = vpack.c.b16 %v41, %v40
    %v45 = vpack.c.b16 %v43, %v42
    %vm48 = vcmask 261120
    %v50 = vsel %vm48, %v24, 0
    %52 = vmatprep.subr.bf16.mxu0 0
    %53 = vmatpush1.bf16.msra.mxu0 0
    %54 = vmatprep.subr.bf16.mxu0 0
    %55 = vmatpush1.bf16.msra.mxu0 0
    %56 = vmatprep.subr.bf16.mxu0 0
    %57 = vmatpush1.bf16.msra.mxu0 0
    %58 = vmatprep.subr.bf16.mxu0 0
    %59 = vmatpush1.bf16.msra.mxu0 0
    %60 = vmatprep.subr.bf16.mxu0 0
    %61 = vmatpush1.bf16.msra.mxu0 0
    %62 = vmatprep.subr.bf16.mxu0 0
    %63 = vmatpush1.bf16.msra.mxu0 0
    %64 = vmatprep.subr.bf16.mxu0 0
    %65 = vmatpush1.bf16.msra.mxu0 %v45
    %66 = vmatprep.subr.bf16.mxu0 0
    %67 = vmatpush1.bf16.msra.mxu0 %v44
    %68 = vmatprep.subr.bf16.mxu0 0
    %69 = vmatpush2.bf16.msra.mxu0 0
    %70 = vmatprep.subr.bf16.mxu0 0
    %71 = vmatpush2.bf16.msra.mxu0 0
    %72 = vmatprep.subr.bf16.mxu0 0
    %73 = vmatpush2.bf16.msra.mxu0 0
    %74 = vmatprep.subr.bf16.mxu0 0
    %75 = vmatpush2.bf16.msra.mxu0 0
    %76 = vmatprep.subr.bf16.mxu0 0
    %77 = vmatpush2.bf16.msra.mxu0 0
    %78 = vmatprep.subr.bf16.mxu0 0
    %79 = vmatpush2.bf16.msra.mxu0 0
    %80 = vmatprep.subr.bf16.mxu0 0
    %81 = vmatpush2.bf16.msra.mxu0 0
    %82 = vmatprep.subr.bf16.mxu0 0
    %83 = vmatpush2.bf16.msra.mxu0 0
    %84 = vmatprep.mubr.bf16.mxu0 0
    %85 = vmatmul.mubr.bf16.gmra.mxu0 %v50
    %v86 = vpop.f32.mrf.mxu0
    %v87 = vadd.f32 %v34, %v86
    %v88 = vpop.f32.mrf.mxu0
    %v89 = vpop.f32.mrf.mxu0
    %v90 = vadd.f32 %v34, %v89
    %v91 = vpop.f32.mrf.mxu0
    %92 = vdwg.mxu0
    %v93 = vmax.f32 %v87, 0.0
    %v94 = vmax.f32 %v90, 0.0
    %v95 = vpack.c.bf16 %v94, %v93
    %v96 = vld [vmem:[%s3] sm:$0xf]
    %v97 = vld [vmem:[%s3 + $0x4] sm:$0xf]
    %v98 = vld [vmem:[%s3 + $0x8] sm:$0xf]
    %v99 = vld [vmem:[%s3 + $0xc] sm:$0xf]
    %v100 = vld [vmem:[%s3 + $0x10] sm:$0xf]
    %v101 = vld [vmem:[%s3 + $0x14] sm:$0xf]
    %v102 = vld [vmem:[%s3 + $0x18] sm:$0xf]
    %v103 = vld [vmem:[%s3 + $0x1c] sm:$0xf]
    %v104 = vld [vmem:[%s3 + $0x20] sm:$0xf]
    %v105 = vld [vmem:[%s3 + $0x24] sm:$0xf]
    %v106 = vld [vmem:[%s3 + $0x28] sm:$0xf]
    %v107 = vld [vmem:[%s3 + $0x2c] sm:$0xf]
    %v108 = vld [vmem:[%s3 + $0x30] sm:$0xf]
    %v109 = vld [vmem:[%s3 + $0x34] sm:$0xf]
    %v110 = vld [vmem:[%s3 + $0x38] sm:$0xf]
    %v111 = vld [vmem:[%s3 + $0x3c] sm:$0xf]
    %v112 = vld [vmem:[%s4] sm:$0x1]
    %v114 = vlaneseq
    %v115 = vshrl.u32 %v114, 7
    %v116 = vsub.s32 0, %v115
    %v117 = vrot.slane %v112, %v116
    %v135 = vunpack.c.l.b16 %v96
    %v136 = vunpack.c.l.b16 %v97
    %v137 = vunpack.c.l.b16 %v98
    %v138 = vunpack.c.l.b16 %v99
    %v139 = vunpack.c.l.b16 %v100
    %v140 = vunpack.c.l.b16 %v101
    %v141 = vunpack.c.l.b16 %v102
    %v142 = vunpack.c.l.b16 %v103
    %v143 = vunpack.c.l.b16 %v104
    %v144 = vunpack.c.l.b16 %v105
    %v145 = vunpack.c.l.b16 %v106
    %v146 = vunpack.c.l.b16 %v107
    %v147 = vunpack.c.l.b16 %v108
    %v148 = vunpack.c.l.b16 %v109
    %v149 = vunpack.c.l.b16 %v110
    %v150 = vunpack.c.l.b16 %v111
    %v151 = vpack.c.b16 %v136, %v135
    %v152 = vpack.c.b16 %v138, %v137
    %v153 = vpack.c.b16 %v140, %v139
    %v154 = vpack.c.b16 %v142, %v141
    %v155 = vpack.c.b16 %v144, %v143
    %v156 = vpack.c.b16 %v146, %v145
    %v157 = vpack.c.b16 %v148, %v147
    %v158 = vpack.c.b16 %v150, %v149
    %167 = vmatprep.subr.bf16.mxu0 0
    %168 = vmatpush1.bf16.msra.mxu0 %v158
    %169 = vmatprep.subr.bf16.mxu0 0
    %170 = vmatpush1.bf16.msra.mxu0 %v157
    %171 = vmatprep.subr.bf16.mxu0 0
    %172 = vmatpush1.bf16.msra.mxu0 %v156
    %173 = vmatprep.subr.bf16.mxu0 0
    %174 = vmatpush1.bf16.msra.mxu0 %v155
    %175 = vmatprep.subr.bf16.mxu0 0
    %176 = vmatpush1.bf16.msra.mxu0 %v154
    %177 = vmatprep.subr.bf16.mxu0 0
    %178 = vmatpush1.bf16.msra.mxu0 %v153
    %179 = vmatprep.subr.bf16.mxu0 0
    %180 = vmatpush1.bf16.msra.mxu0 %v152
    %181 = vmatprep.subr.bf16.mxu0 0
    %182 = vmatpush1.bf16.msra.mxu0 %v151
    %183 = vmatprep.subr.bf16.mxu0 0
    %184 = vmatpush2.bf16.msra.mxu0 0
    %185 = vmatprep.subr.bf16.mxu0 0
    %186 = vmatpush2.bf16.msra.mxu0 0
    %187 = vmatprep.subr.bf16.mxu0 0
    %188 = vmatpush2.bf16.msra.mxu0 0
    %189 = vmatprep.subr.bf16.mxu0 0
    %190 = vmatpush2.bf16.msra.mxu0 0
    %191 = vmatprep.subr.bf16.mxu0 0
    %192 = vmatpush2.bf16.msra.mxu0 0
    %193 = vmatprep.subr.bf16.mxu0 0
    %194 = vmatpush2.bf16.msra.mxu0 0
    %195 = vmatprep.subr.bf16.mxu0 0
    %196 = vmatpush2.bf16.msra.mxu0 0
    %197 = vmatprep.subr.bf16.mxu0 0
    %198 = vmatpush2.bf16.msra.mxu0 0
    %199 = vmatprep.mubr.bf16.mxu0 0
    %200 = vmatmul.mubr.bf16.gmra.mxu0 %v95
    %v201 = vpop.f32.mrf.mxu0
    %v202 = vadd.f32 %v117, %v201
    %v203 = vpop.f32.mrf.mxu0
    %v204 = vpop.f32.mrf.mxu0
    %v205 = vadd.f32 %v117, %v204
    %v206 = vpop.f32.mrf.mxu0
    %207 = vdwg.mxu0
    %208 = vst.msk [vmem:[#allocation2] sm:$0xff] %vm48, %v202
    %vm209 = vcmask 257024
    %210 = vst.msk [vmem:[#allocation2 + $0x8] sm:$0xf] %vm209, %v205
    // Predicated region
    $region22: #{tpu_custom_call.1} parent=1 // pred_check
      _
    $region23: #{tpu_custom_call.1} parent=1 // pred_check_branch
      %212 = sbr.rel (0) target = $region25
    $region24: #{tpu_custom_call.1} parent=1 // pred_region
      %s214 = ssub.s32 256, 256
      %215 = vsyncadd [#allocation3], %s214
      %s216 = sshll.u32 [#allocation2], 4
      %s217 = int_to_ptr.vmem [resolvable:$true] %s216
      %222 = dma.vmem_to_hbm [thread:$0]  %s217, 256, %s5, [#allocation3], 128, 128, 8
    $region25: #{tpu_custom_call.1} parent=1 // pred_fallthru
      _
    // Predicated region
    $region26: #{tpu_custom_call.1} parent=1 // pred_check
      _
    $region27: #{tpu_custom_call.1} parent=1 // pred_check_branch
      %224 = sbr.rel (0) target = $region29
    $region28: #{tpu_custom_call.1} parent=1 // pred_region
      %225 = dma.done [#allocation3], 256
    $region29: #{tpu_custom_call.1} parent=1 // pred_fallthru
      _
    %226 = vsyncpa [#allocation3], 1

</llo_original>
